<compile_context>
chip_gen: v6e
topology: v6e:2x2x1
jax: 0.10.0
libtpu: 0.0.40
codegen_flags: <defaults>
</compile_context>

<pallas_src>
import jax
import jax.numpy as jnp
from jax.experimental import pallas as pl
from jax.experimental.pallas import tpu as pltpu


def modelsum_kernel(x_ref, w_ref, b_ref, o_ref):
    # bf16 MXU operands (x cast in-kernel, W already bf16), f32 accumulation,
    # f32 bias add, single lane-dense store into the 128-wide output.
    x_bf16 = x_ref[...].astype(jnp.bfloat16)
    acc = jnp.dot(x_bf16, w_ref[...], preferred_element_type=jnp.float32)
    o_ref[...] = (acc + b_ref[...]).astype(o_ref.dtype)


def fold_components(weights, biases):
    """Pre-reduce the ModelSum components outside the kernel.

    weights: (K, D_in, D_out) f32, biases: (K, D_out) f32.  Components
    0..K-2 are frozen, component K-1 is the training component; their forward
    values simply add, so we fold them into one effective Linear.  In a real
    training loop the frozen partial sum is cached once — it never changes —
    so this costs nothing per step and removes K× of the kernel's DMA bytes.
    """
    w_eff = jnp.sum(weights, axis=0)                 # f32 reduce, done once
    b_eff = jnp.sum(biases, axis=0, keepdims=True)   # (1, D_out) f32
    return w_eff.astype(jnp.bfloat16), b_eff


def modelsum_forward(x, w_eff_bf16, b_eff):
    """x: (B, D_in) f32; w_eff_bf16: (D_in, D_out) bf16; b_eff: (1, D_out) f32."""
    B, _ = x.shape
    _, D_out = w_eff_bf16.shape

    return pl.pallas_call(
        modelsum_kernel,
        out_shape=jax.ShapeDtypeStruct((B, D_out), x.dtype),
        # No grid: all operands fully VMEM resident (x 1 KiB, W_eff 8 KiB bf16,
        # b 0.5 KiB, out 4 KiB).  Memory-space-only specs — no blocked-index
        # plumbing for a single invocation.
        in_specs=[
            pl.BlockSpec(memory_space=pltpu.MemorySpace.VMEM),  # x       (B, D_in)
            pl.BlockSpec(memory_space=pltpu.MemorySpace.VMEM),  # W_eff   (D_in, D_out) bf16
            pl.BlockSpec(memory_space=pltpu.MemorySpace.VMEM),  # b_eff   (1, D_out)
        ],
        out_specs=pl.BlockSpec(memory_space=pltpu.MemorySpace.VMEM),
        # TODO(synk): at production B, add a "parallel" grid axis over 128-multiple
        #   B tiles (pltpu.CompilerParams(dimension_semantics=("parallel",))) so
        #   v7x's 2 TensorCores both run; keep the output lane dim a multiple of 128.
        # TODO(synk): at production sizes set vmem_limit_bytes and re-derive the
        #   tile budget against v7x's 64 MiB VMEM (BlockSpec double-buffers each
        #   input); shrink the B tile first, never the 128-lane D_out tile; if
        #   D_in needs a reduction grid axis, put it last with an f32 scratch
        #   accumulator (pl.when init/finalize) and >=512-wide tiles.
    )(x, w_eff_bf16, b_eff)


def modelsum_reference(x, weights, biases):
    # Exact f32 reference of ModelSum.forward: training component + detached
    # sum of frozen components == plain sum over all K component outputs.
    outs = (
        jnp.einsum("bd,kde->kbe", x, weights, precision=jax.lax.Precision.HIGHEST)
        + biases[:, None, :]
    )
    return outs.sum(0)


if __name__ == "__main__":
    B, D_in, D_out, K = 8, 32, 128, 3  # K Linear components in the ModelSum

    key = jax.random.PRNGKey(0)
    kx, kw, kb = jax.random.split(key, 3)
    x = jax.random.normal(kx, (B, D_in), dtype=jnp.float32)
    weights = jax.random.normal(kw, (K, D_in, D_out), dtype=jnp.float32) * 0.1
    biases = jax.random.normal(kb, (K, D_out), dtype=jnp.float32) * 0.1

    w_eff_bf16, b_eff = fold_components(weights, biases)
    out = jax.block_until_ready(modelsum_forward(x, w_eff_bf16, b_eff))
    assert out.shape == (B, D_out) and out.dtype == x.dtype

    # Tight check against a reference that uses the same bf16 MXU operands and
    # f32 accumulation the kernel uses.
    ref_mxu = (
        jnp.dot(
            x.astype(jnp.bfloat16).astype(jnp.float32),
            w_eff_bf16.astype(jnp.float32),
            precision=jax.lax.Precision.HIGHEST,
        )
        + b_eff
    )
    assert jnp.allclose(out, ref_mxu, atol=1e-4, rtol=1e-4)

    # Semantics check against the exact f32 ModelSum.forward (sum of per-
    # component Linear outputs); tolerance sized for bf16 operand rounding.
    ref_exact = modelsum_reference(x, weights, biases)
    assert jnp.allclose(out, ref_exact, atol=5e-2, rtol=5e-2)

    print("KERNEL_OK")
</pallas_src>

<mosaic_0001>
module attributes {stable_mosaic.version = 11 : i64} {
  func.func @modelsum_kernel(%arg0: memref<8x32xf32, #tpu.memory_space<vmem>>, %arg1: memref<32x128xbf16, #tpu.memory_space<vmem>>, %arg2: memref<1x128xf32, #tpu.memory_space<vmem>>, %arg3: memref<8x128xf32, #tpu.memory_space<vmem>>) attributes {dimension_semantics = [], scalar_prefetch = 0 : i64, scratch_operands = 0 : i64, tpu.core_type = #tpu.core_type<tc>} {
    %c0 = arith.constant 0 : index
    %c0_0 = arith.constant 0 : index
    %0 = vector.load %arg0[%c0, %c0_0] : memref<8x32xf32, #tpu.memory_space<vmem>>, vector<8x32xf32>
    %1 = arith.truncf %0 : vector<8x32xf32> to vector<8x32xbf16>
    %c0_1 = arith.constant 0 : index
    %c0_2 = arith.constant 0 : index
    %2 = vector.load %arg1[%c0_1, %c0_2] : memref<32x128xbf16, #tpu.memory_space<vmem>>, vector<32x128xbf16>
    %cst = arith.constant dense<0.000000e+00> : vector<8x128xf32>
    %3 = tpu.matmul %1, %2, %cst {dimension_numbers = #tpu.dot_dimension_numbers<[1], [0], [0], [1], [0, 0, 1, 1], [], []>} : vector<8x32xbf16>, vector<32x128xbf16>, vector<8x128xf32> -> vector<8x128xf32>
    %c0_3 = arith.constant 0 : index
    %c0_4 = arith.constant 0 : index
    %4 = vector.load %arg2[%c0_3, %c0_4] : memref<1x128xf32, #tpu.memory_space<vmem>>, vector<1x128xf32>
    %5 = vector.broadcast %4 : vector<1x128xf32> to vector<8x128xf32>
    %6 = arith.addf %3, %5 : vector<8x128xf32>
    %c0_5 = arith.constant 0 : index
    %c0_6 = arith.constant 0 : index
    %7 = vector.load %arg3[%c0_5, %c0_6] : memref<8x128xf32, #tpu.memory_space<vmem>>, vector<8x128xf32>
    tpu.vector_store %arg3[%c0_5, %c0_6], %6 {strides = array<i32>} : memref<8x128xf32, #tpu.memory_space<vmem>>, vector<8x128xf32>,
    return
  }
}

</mosaic_0001>

<llo_original>
// kernel: tpu_custom_call.1
$region0: #{tpu_custom_call.1}
  #allocation0 [shape = 'u32[]', space=smem, size = 0x4, offset = 0x4, fixed_abs, tag = 'smem constant byte address 0x4 - core index']
  #allocation1 [shape = 'u32[144,128]{1,0:T(1,128)}', space=vmem, size = 0x12000, scoped, tag = 'internal scratch']
  %s0 = inlined_call_operand.hbm [shape: f32[8,32], index: 0, kind: input, shape index: {}]
  %s1 = inlined_call_operand.hbm [shape: bf16[32,128], index: 1, kind: input, shape index: {}]
  %s2 = inlined_call_operand.vmem [shape: f32[1,128], index: 2, kind: input, shape index: {}]
  %s3 = inlined_call_operand.hbm [shape: f32[8,128], index: 3, kind: output, shape index: {}]
  %s4 = sld [smem:[#allocation0]]
  $region30: #{tpu_custom_call.1} parent=0
    _
  %s6 = ssub.s32 1, %s4
  %s7 = scalar_select 0, %s6, %s4
  $region1: #{tpu_custom_call.1} parent=0
    #allocation2 [shape = 'u8[4096]{0}', space=vmem, size = 0x1000, scoped, tag = 'input window, operand 0, single buffered']
    #allocation3 [shape = 's32[1]{0}', space=sflag, size = 0x4, scoped, tag = 'scoped memory for tpu_custom_call.1']
    #allocation4 [shape = 's32[1]{0}', space=sflag, size = 0x4, scoped, tag = 'scoped memory for tpu_custom_call.1']
    #allocation5 [shape = 'u8[8192]{0}', space=vmem, size = 0x2000, scoped, tag = 'input window, operand 1, single buffered']
    #allocation6 [shape = 's32[1]{0}', space=sflag, size = 0x4, scoped, tag = 'scoped memory for tpu_custom_call.1']
    #allocation7 [shape = 'u8[4096]{0}', space=vmem, size = 0x1000, scoped, tag = 'output window, operand 0, single buffered']
    %8 = vsyncpa [#allocation3], 0
    %9 = vsyncpa [#allocation6], 0
    %10 = vsyncpa [#allocation4], 0
    // Predicated region
    $region2: #{tpu_custom_call.1} parent=1 // pred_check
      _
    $region3: #{tpu_custom_call.1} parent=1 // pred_check_branch
      %12 = sbr.rel (0) target = $region5
    $region4: #{tpu_custom_call.1} parent=1 // pred_region
      %s14 = ssub.s32 128, 128
      %15 = vsyncadd [#allocation3], %s14
      %s17 = sshll.u32 [#allocation2], 4
      %s18 = int_to_ptr.vmem [resolvable:$true] %s17
      %20 = dma.hbm_to_vmem [thread:$0]  %s0, 128, %s18, [#allocation3]
    $region5: #{tpu_custom_call.1} parent=1 // pred_fallthru
      _
    // Predicated region
    $region6: #{tpu_custom_call.1} parent=1 // pred_check
      _
    $region7: #{tpu_custom_call.1} parent=1 // pred_check_branch
      %22 = sbr.rel (0) target = $region9
    $region8: #{tpu_custom_call.1} parent=1 // pred_region
      %s24 = ssub.s32 256, 256
      %25 = vsyncadd [#allocation6], %s24
      %s26 = sshll.u32 [#allocation5], 4
      %s27 = int_to_ptr.vmem [resolvable:$true] %s26
      %32 = dma.hbm_to_vmem [thread:$0]  %s1, 256, %s27, [#allocation6], 64, 64, 4
    $region9: #{tpu_custom_call.1} parent=1 // pred_fallthru
      _
    // Predicated region
    $region10: #{tpu_custom_call.1} parent=1 // pred_check
      _
    $region11: #{tpu_custom_call.1} parent=1 // pred_check_branch
      %34 = sbr.rel (0) target = $region13
    $region12: #{tpu_custom_call.1} parent=1 // pred_region
      _
    $region13: #{tpu_custom_call.1} parent=1 // pred_fallthru
      _
    // Predicated region
    $region14: #{tpu_custom_call.1} parent=1 // pred_check
      _
    $region15: #{tpu_custom_call.1} parent=1 // pred_check_branch
      %36 = sbr.rel (0) target = $region17
    $region16: #{tpu_custom_call.1} parent=1 // pred_region
      %37 = dma.done [#allocation3], 128
    $region17: #{tpu_custom_call.1} parent=1 // pred_fallthru
      _
    // Predicated region
    $region18: #{tpu_custom_call.1} parent=1 // pred_check
      _
    $region19: #{tpu_custom_call.1} parent=1 // pred_check_branch
      %39 = sbr.rel (0) target = $region21
    $region20: #{tpu_custom_call.1} parent=1 // pred_region
      %40 = dma.done [#allocation6], 256
    $region21: #{tpu_custom_call.1} parent=1 // pred_fallthru
      _
    %v42 = vld [vmem:[#allocation2] sm:$0xff]
    %v43 = vpack.c.bf16 %v42, %v42
    %v44 = vld [vmem:[#allocation5] sm:$0xf]
    %v45 = vld [vmem:[#allocation5 + $0x4] sm:$0xf]
    %v46 = vld [vmem:[#allocation5 + $0x8] sm:$0xf]
    %v47 = vld [vmem:[#allocation5 + $0xc] sm:$0xf]
    %v48 = vld [vmem:[%s2] sm:$0x1]
    %v50 = vlaneseq
    %v51 = vshrl.u32 %v50, 7
    %v52 = vsub.s32 0, %v51
    %v53 = vrot.slane %v48, %v52
    %v59 = vunpack.c.l.b16 %v44
    %v60 = vunpack.c.l.b16 %v45
    %v61 = vunpack.c.l.b16 %v46
    %v62 = vunpack.c.l.b16 %v47
    %v63 = vpack.c.b16 %v60, %v59
    %v64 = vpack.c.b16 %v62, %v61
    %vm67 = vcmask 261120
    %v69 = vsel %vm67, %v43, 0
    %71 = vmatprep.subr.bf16.mxu0 0
    %72 = vmatpush1.bf16.msra.mxu0 0
    %73 = vmatprep.subr.bf16.mxu0 0
    %74 = vmatpush1.bf16.msra.mxu0 0
    %75 = vmatprep.subr.bf16.mxu0 0
    %76 = vmatpush1.bf16.msra.mxu0 0
    %77 = vmatprep.subr.bf16.mxu0 0
    %78 = vmatpush1.bf16.msra.mxu0 0
    %79 = vmatprep.subr.bf16.mxu0 0
    %80 = vmatpush1.bf16.msra.mxu0 0
    %81 = vmatprep.subr.bf16.mxu0 0
    %82 = vmatpush1.bf16.msra.mxu0 0
    %83 = vmatprep.subr.bf16.mxu0 0
    %84 = vmatpush1.bf16.msra.mxu0 %v64
    %85 = vmatprep.subr.bf16.mxu0 0
    %86 = vmatpush1.bf16.msra.mxu0 %v63
    %87 = vmatprep.subr.bf16.mxu0 0
    %88 = vmatpush2.bf16.msra.mxu0 0
    %89 = vmatprep.subr.bf16.mxu0 0
    %90 = vmatpush2.bf16.msra.mxu0 0
    %91 = vmatprep.subr.bf16.mxu0 0
    %92 = vmatpush2.bf16.msra.mxu0 0
    %93 = vmatprep.subr.bf16.mxu0 0
    %94 = vmatpush2.bf16.msra.mxu0 0
    %95 = vmatprep.subr.bf16.mxu0 0
    %96 = vmatpush2.bf16.msra.mxu0 0
    %97 = vmatprep.subr.bf16.mxu0 0
    %98 = vmatpush2.bf16.msra.mxu0 0
    %99 = vmatprep.subr.bf16.mxu0 0
    %100 = vmatpush2.bf16.msra.mxu0 0
    %101 = vmatprep.subr.bf16.mxu0 0
    %102 = vmatpush2.bf16.msra.mxu0 0
    %103 = vmatprep.mubr.bf16.mxu0 0
    %104 = vmatmul.mubr.bf16.gmra.mxu0 %v69
    %v105 = vpop.f32.mrf.mxu0
    %v106 = vadd.f32 %v53, %v105
    %v107 = vpop.f32.mrf.mxu0
    %v108 = vpop.f32.mrf.mxu0
    %v109 = vpop.f32.mrf.mxu0
    %110 = vdwg.mxu0
    %111 = vst [vmem:[#allocation7] sm:$0xff] %v106
    // Predicated region
    $region22: #{tpu_custom_call.1} parent=1 // pred_check
      _
    $region23: #{tpu_custom_call.1} parent=1 // pred_check_branch
      %113 = sbr.rel (0) target = $region25
    $region24: #{tpu_custom_call.1} parent=1 // pred_region
      %s115 = ssub.s32 128, 128
      %116 = vsyncadd [#allocation4], %s115
      %s118 = sshll.u32 [#allocation7], 4
      %s119 = int_to_ptr.vmem [resolvable:$true] %s118
      %121 = dma.vmem_to_hbm [thread:$0]  %s119, 128, %s3, [#allocation4]
    $region25: #{tpu_custom_call.1} parent=1 // pred_fallthru
      _
    // Predicated region
    $region26: #{tpu_custom_call.1} parent=1 // pred_check
      _
    $region27: #{tpu_custom_call.1} parent=1 // pred_check_branch
      %123 = sbr.rel (0) target = $region29
    $region28: #{tpu_custom_call.1} parent=1 // pred_region
      %124 = dma.done [#allocation4], 128
    $region29: #{tpu_custom_call.1} parent=1 // pred_fallthru
      _
    %125 = vsyncpa [#allocation3], 1
    %126 = vsyncpa [#allocation6], 1
    %127 = vsyncpa [#allocation4], 1

</llo_original>
